<compile_context>
chip_gen: v7x
topology: tpu7x:2x2x1
jax: 0.10.0
libtpu: 0.0.40
codegen_flags: <defaults>
</compile_context>

<pallas_src>
import functools

import jax
import jax.numpy as jnp
from jax.experimental import pallas as pl
from jax.experimental.pallas import tpu as pltpu


def _round_up(n, m):
    return ((int(n) + m - 1) // m) * m


# ----------------------------- Fused Pallas kernel --------------------------
def _mlp_fused_kernel(*refs, n_hidden: int, matmul_dtype):
    """One batch tile of the full MLP forward.

    refs layout:
      (x, w0, b0, ..., w_{n_hidden-1}, b_{n_hidden-1}, w_fin, b_fin, out)
    Hidden weights are the packed (concatenated / block-diagonal, lane-padded)
    community weights, so the running activation `h` carries all communities
    side by side on the lane axis.  The final weight is the per-community
    final Linear replicated along K, so the single final matmul also performs
    the community sum.
    """
    x_ref = refs[0]
    param_refs = refs[1:-1]
    o_ref = refs[-1]

    h = x_ref[...]
    for l in range(n_hidden):
        w = param_refs[2 * l][...]
        b = param_refs[2 * l + 1][...]
        y = jnp.dot(h.astype(matmul_dtype), w.astype(matmul_dtype),
                    preferred_element_type=jnp.float32) + b
        # swish(y) = y * sigmoid(y); sigmoid lowers to the EUP path and the
        # elementwise math stays in f32 (v5e has no bf16 VPU/EUP).
        h = y * jax.nn.sigmoid(y)

    w_fin = param_refs[-2][...]
    b_fin = param_refs[-1][...]
    out = jnp.dot(h.astype(matmul_dtype), w_fin.astype(matmul_dtype),
                  preferred_element_type=jnp.float32) + b_fin
    o_ref[...] = out.astype(o_ref.dtype)  # lane-dense (tile_b, 128) store


# ----------------------------- Parameter setup ------------------------------
def init_mlp_params(key, input_dim, output_dim, nunits, ncoms, identity_init):
    """Build the same parameter list the PyTorch MLP.__init__ builds.

    Returns a list of (w_t, b) with w_t of shape (in_dim, out_dim), i.e. the
    transpose of PyTorch's (out_dim, in_dim) Linear weight, and b of (1, out).
    """
    params = []
    ncoms = int(ncoms)

    def make_linear(key, in_dim, out_dim, make_identity):
        kw, kb = jax.random.split(key)
        bound = 1.0 / jnp.sqrt(jnp.float32(in_dim))
        w = jax.random.uniform(kw, (out_dim, in_dim), jnp.float32, -bound, bound)
        if make_identity:
            w = jnp.eye(out_dim, in_dim, dtype=jnp.float32)  # nn.init.eye_
        b = jax.random.uniform(kb, (1, out_dim), jnp.float32, -bound, bound)
        return w.T, b

    for _ in range(ncoms):
        in_dim = input_dim
        for nunit in nunits:
            key, sub = jax.random.split(key)
            params.append(make_linear(sub, in_dim, nunit, identity_init == 1))
            in_dim = nunit
    key, sub = jax.random.split(key)
    params.append(make_linear(sub, in_dim, output_dim, False))
    return params


def pack_params(params, nunits, ncoms, *, lane=128):
    """Collapse the per-community towers into wide / block-diagonal weights,
    zero-pad all packed widths (and the final out dim) to a multiple of 128,
    and replicate the final weight along K so the final matmul performs the
    community sum.  All padding is with exact zeros -> numerically exact.
    """
    L = len(nunits)
    assert L >= 1, "at least one hidden layer expected"
    ncoms = int(ncoms)

    def pad_to(a, rows, cols):
        return jnp.pad(a, ((0, rows - a.shape[0]), (0, cols - a.shape[1])))

    widths = [int(n) * ncoms for n in nunits]
    padded_widths = [_round_up(w, lane) for w in widths]

    ws, bs = [], []
    prev_pad = params[0][0].shape[0]  # input_dim (layer-0 K is not padded)
    for l in range(L):
        layer_ws = [params[c * L + l][0] for c in range(ncoms)]
        layer_bs = [params[c * L + l][1] for c in range(ncoms)]
        if l == 0:
            w = jnp.concatenate(layer_ws, axis=1)            # (in, ncoms*n0)
        else:
            # TODO(synk): for ncoms > ~4 use stacked (ncoms, n_prev, n_l)
            # weights + batched dot_general instead of block-diagonal zeros.
            w = jax.scipy.linalg.block_diag(*layer_ws)       # block-diagonal
        b = jnp.concatenate(layer_bs, axis=1)
        ws.append(pad_to(w, prev_pad, padded_widths[l]))
        bs.append(pad_to(b, 1, padded_widths[l]))
        prev_pad = padded_widths[l]

    w_fin, b_fin = params[-1]
    output_dim = w_fin.shape[1]
    out_pad = _round_up(output_dim, lane)
    # Replicate along K: out = sum_c h_c @ w_fin  ==  concat_c(h_c) @ stack_c(w_fin)
    w_fin_rep = jnp.concatenate([w_fin] * ncoms, axis=0)     # (ncoms*n_last, out)
    w_fin_rep = pad_to(w_fin_rep, prev_pad, out_pad)
    b_fin_p = pad_to(b_fin, 1, out_pad)
    return ws, bs, w_fin_rep, b_fin_p


# ----------------------------- Forward pass (fused) -------------------------
def mlp_forward(x, packed_params, output_dim, *, tile_b=None,
                matmul_dtype=jnp.float32):
    # matmul_dtype=jnp.bfloat16 is the recommended setting on v6e/v7x (MXU
    # throughput + halved weight footprint); default f32 keeps 1e-5 accuracy.
    packed_ws, packed_bs, w_fin, b_fin = packed_params
    batch, input_dim = x.shape
    out_pad = w_fin.shape[1]
    n_hidden = len(packed_ws)

    # Batch tile: multiple of 8, capped at 512 (per-grid-step overhead is
    # amortized well past ~85% of HBM roofline there).  Keep >= 2 grid steps
    # when the batch allows it so v7x's two TensorCores both get work.
    rounded = _round_up(batch, 8)
    if tile_b is None:
        tile_b = min(512, rounded)
        if rounded >= 16 and pl.cdiv(rounded, tile_b) < 2:
            tile_b = _round_up(pl.cdiv(rounded, 2), 8)
    padded = pl.cdiv(batch, tile_b) * tile_b
    xp = jnp.pad(x, ((0, padded - batch), (0, 0))) if padded != batch else x
    grid = (padded // tile_b,)

    flat_params = []
    for w, b in zip(packed_ws, packed_bs):
        flat_params.extend((w, b))
    flat_params.extend((w_fin, b_fin))

    # Activations stream over the batch grid; weights/biases use a
    # grid-invariant index_map (same block every step) so they stay resident
    # in VMEM instead of being re-DMA'd.
    # TODO(synk): at larger model scale, single-buffer the resident weights
    # via pipeline_mode=pl.Buffered(1) to halve their VMEM footprint.
    in_specs = [pl.BlockSpec((tile_b, input_dim), lambda i: (i, 0))]
    in_specs += [pl.BlockSpec(p.shape, lambda i: (0, 0)) for p in flat_params]
    out_spec = pl.BlockSpec((tile_b, out_pad), lambda i: (i, 0))

    # VMEM estimate (default double-buffering on every operand); only raise
    # the scoped limit if we would exceed v5e's 16 MiB default.
    param_bytes = sum(int(p.size) * p.dtype.itemsize for p in flat_params)
    act_bytes = tile_b * (input_dim + out_pad) * 4
    vmem_needed = 2 * (param_bytes + act_bytes)
    vmem_limit = None
    if vmem_needed > 12 * 1024 * 1024:
        vmem_limit = min(2 * vmem_needed, 64 * 1024 * 1024)

    # Advisory cost estimate for the XLA scheduler (counts padded zeros too).
    flops = sum(2 * padded * w.shape[0] * w.shape[1] for w in flat_params[0::2])
    transcendentals = padded * sum(w.shape[1] for w in packed_ws)
    bytes_accessed = 4 * (xp.size + sum(int(p.size) for p in flat_params)
                          + padded * out_pad)

    kern = functools.partial(_mlp_fused_kernel, n_hidden=n_hidden,
                             matmul_dtype=matmul_dtype)
    out = pl.pallas_call(
        kern,
        out_shape=jax.ShapeDtypeStruct((padded, out_pad), x.dtype),
        grid=grid,
        in_specs=in_specs,
        out_specs=out_spec,
        compiler_params=pltpu.CompilerParams(
            dimension_semantics=("parallel",),
            vmem_limit_bytes=vmem_limit),
        cost_estimate=pl.CostEstimate(flops=int(flops),
                                      transcendentals=int(transcendentals),
                                      bytes_accessed=int(bytes_accessed)),
    )(xp, *flat_params)
    return out[:batch, :output_dim]


# ----------------------------- Reference (pure JAX) -------------------------
def mlp_forward_ref(data, params, ncoms, nlayers):
    """Mirrors the PyTorch MLP.forward exactly, on the unpacked params."""
    def swish(x):
        return x * jax.nn.sigmoid(x)

    idx = 0
    out = None
    for n in range(int(ncoms)):
        datal = data
        for _ in range(nlayers):
            w_t, b = params[idx]
            datal = swish(datal @ w_t + b)
            idx += 1
        out = datal if n == 0 else out + datal
    w_t, b = params[-1]
    return out @ w_t + b


# ----------------------------- Main ------------------------------------------
if __name__ == "__main__":
    # Small shapes consistent with the module's constructor.
    batch = 8
    input_dim = 16
    output_dim = 8
    nunits = [32, 32]       # Nunits
    ncoms = 2               # Ncoms
    identity_init = 0

    key = jax.random.PRNGKey(0)
    kx, kp = jax.random.split(key)
    x = jax.random.normal(kx, (batch, input_dim), jnp.float32)

    params = init_mlp_params(kp, input_dim, output_dim, nunits, ncoms,
                             identity_init)
    packed = pack_params(params, nunits, ncoms)

    out = mlp_forward(x, packed, output_dim)
    out = jax.block_until_ready(out)

    ref = mlp_forward_ref(x, params, ncoms, len(nunits))
    assert out.shape == (batch, output_dim), out.shape
    assert jnp.allclose(out, ref, atol=1e-5, rtol=1e-5), (
        float(jnp.max(jnp.abs(out - ref))))

    print("KERNEL_OK")
</pallas_src>

<mosaic_0001>
module attributes {stable_mosaic.version = 11 : i64} {
  func.func @_mlp_fused_kernel(%arg0: i32, %arg1: memref<8x16xf32, #tpu.memory_space<vmem>>, %arg2: memref<16x128xf32, #tpu.memory_space<vmem>>, %arg3: memref<1x128xf32, #tpu.memory_space<vmem>>, %arg4: memref<128x128xf32, #tpu.memory_space<vmem>>, %arg5: memref<1x128xf32, #tpu.memory_space<vmem>>, %arg6: memref<128x128xf32, #tpu.memory_space<vmem>>, %arg7: memref<1x128xf32, #tpu.memory_space<vmem>>, %arg8: memref<8x128xf32, #tpu.memory_space<vmem>>) attributes {dimension_semantics = [#tpu.dimension_semantics<parallel>], iteration_bounds = array<i64: 1>, scalar_prefetch = 0 : i64, scratch_operands = 0 : i64, tpu.core_type = #tpu.core_type<tc>, window_params = [{transform_indices = @transform_0, window_bounds = array<i64: 8, 16>}, {pipeline_mode = #tpu.pipeline_mode<synchronous>, transform_indices = @transform_1, window_bounds = array<i64: 16, 128>}, {pipeline_mode = #tpu.pipeline_mode<synchronous>, transform_indices = @transform_2, window_bounds = array<i64: 1, 128>}, {pipeline_mode = #tpu.pipeline_mode<synchronous>, transform_indices = @transform_3, window_bounds = array<i64: 128, 128>}, {pipeline_mode = #tpu.pipeline_mode<synchronous>, transform_indices = @transform_4, window_bounds = array<i64: 1, 128>}, {pipeline_mode = #tpu.pipeline_mode<synchronous>, transform_indices = @transform_5, window_bounds = array<i64: 128, 128>}, {pipeline_mode = #tpu.pipeline_mode<synchronous>, transform_indices = @transform_6, window_bounds = array<i64: 1, 128>}, {transform_indices = @transform_7, window_bounds = array<i64: 8, 128>}]} {
    %c0 = arith.constant 0 : index
    %c0_0 = arith.constant 0 : index
    %0 = vector.load %arg1[%c0, %c0_0] : memref<8x16xf32, #tpu.memory_space<vmem>>, vector<8x16xf32>
    %c0_1 = arith.constant 0 : index
    %c0_2 = arith.constant 0 : index
    %1 = vector.load %arg2[%c0_1, %c0_2] : memref<16x128xf32, #tpu.memory_space<vmem>>, vector<16x128xf32>
    %c0_3 = arith.constant 0 : index
    %c0_4 = arith.constant 0 : index
    %2 = vector.load %arg3[%c0_3, %c0_4] : memref<1x128xf32, #tpu.memory_space<vmem>>, vector<1x128xf32>
    %cst = arith.constant dense<0.000000e+00> : vector<8x128xf32>
    %3 = tpu.matmul %0, %1, %cst {dimension_numbers = #tpu.dot_dimension_numbers<[1], [0], [0], [1], [0, 0, 1, 1], [], []>} : vector<8x16xf32>, vector<16x128xf32>, vector<8x128xf32> -> vector<8x128xf32>
    %4 = vector.broadcast %2 : vector<1x128xf32> to vector<8x128xf32>
    %5 = arith.addf %3, %4 : vector<8x128xf32>
    %6 = arith.negf %5 : vector<8x128xf32>
    %7 = math.exp %6 : vector<8x128xf32>
    %cst_5 = arith.constant 1.000000e+00 : f32
    %8 = vector.broadcast %cst_5 : f32 to vector<8x128xf32>
    %9 = arith.addf %8, %7 : vector<8x128xf32>
    %10 = arith.divf %8, %9 : vector<8x128xf32>
    %11 = arith.mulf %5, %10 : vector<8x128xf32>
    %c0_6 = arith.constant 0 : index
    %c0_7 = arith.constant 0 : index
    %12 = vector.load %arg4[%c0_6, %c0_7] : memref<128x128xf32, #tpu.memory_space<vmem>>, vector<128x128xf32>
    %c0_8 = arith.constant 0 : index
    %c0_9 = arith.constant 0 : index
    %13 = vector.load %arg5[%c0_8, %c0_9] : memref<1x128xf32, #tpu.memory_space<vmem>>, vector<1x128xf32>
    %cst_10 = arith.constant dense<0.000000e+00> : vector<8x128xf32>
    %14 = tpu.matmul %11, %12, %cst_10 {dimension_numbers = #tpu.dot_dimension_numbers<[1], [0], [0], [1], [0, 0, 1, 1], [], []>} : vector<8x128xf32>, vector<128x128xf32>, vector<8x128xf32> -> vector<8x128xf32>
    %15 = vector.broadcast %13 : vector<1x128xf32> to vector<8x128xf32>
    %16 = arith.addf %14, %15 : vector<8x128xf32>
    %17 = arith.negf %16 : vector<8x128xf32>
    %18 = math.exp %17 : vector<8x128xf32>
    %cst_11 = arith.constant 1.000000e+00 : f32
    %19 = vector.broadcast %cst_11 : f32 to vector<8x128xf32>
    %20 = arith.addf %19, %18 : vector<8x128xf32>
    %21 = arith.divf %19, %20 : vector<8x128xf32>
    %22 = arith.mulf %16, %21 : vector<8x128xf32>
    %c0_12 = arith.constant 0 : index
    %c0_13 = arith.constant 0 : index
    %23 = vector.load %arg6[%c0_12, %c0_13] : memref<128x128xf32, #tpu.memory_space<vmem>>, vector<128x128xf32>
    %c0_14 = arith.constant 0 : index
    %c0_15 = arith.constant 0 : index
    %24 = vector.load %arg7[%c0_14, %c0_15] : memref<1x128xf32, #tpu.memory_space<vmem>>, vector<1x128xf32>
    %cst_16 = arith.constant dense<0.000000e+00> : vector<8x128xf32>
    %25 = tpu.matmul %22, %23, %cst_16 {dimension_numbers = #tpu.dot_dimension_numbers<[1], [0], [0], [1], [0, 0, 1, 1], [], []>} : vector<8x128xf32>, vector<128x128xf32>, vector<8x128xf32> -> vector<8x128xf32>
    %26 = vector.broadcast %24 : vector<1x128xf32> to vector<8x128xf32>
    %27 = arith.addf %25, %26 : vector<8x128xf32>
    %c0_17 = arith.constant 0 : index
    %c0_18 = arith.constant 0 : index
    %28 = vector.load %arg8[%c0_17, %c0_18] : memref<8x128xf32, #tpu.memory_space<vmem>>, vector<8x128xf32>
    tpu.vector_store %arg8[%c0_17, %c0_18], %27 {strides = array<i32>} : memref<8x128xf32, #tpu.memory_space<vmem>>, vector<8x128xf32>,
    return
  }
  func.func @transform_0(%arg0: i32) -> (i32, i32) {
    %c0_i32 = arith.constant 0 : i32
    %c0_i32_0 = arith.constant 0 : i32
    return %arg0, %c0_i32 : i32, i32
  }
  func.func @transform_1(%arg0: i32) -> (i32, i32) {
    %c0_i32 = arith.constant 0 : i32
    %c0_i32_0 = arith.constant 0 : i32
    %c0_i32_1 = arith.constant 0 : i32
    return %c0_i32, %c0_i32_0 : i32, i32
  }
  func.func @transform_2(%arg0: i32) -> (i32, i32) {
    %c0_i32 = arith.constant 0 : i32
    %c0_i32_0 = arith.constant 0 : i32
    %c0_i32_1 = arith.constant 0 : i32
    return %c0_i32, %c0_i32_0 : i32, i32
  }
  func.func @transform_3(%arg0: i32) -> (i32, i32) {
    %c0_i32 = arith.constant 0 : i32
    %c0_i32_0 = arith.constant 0 : i32
    %c0_i32_1 = arith.constant 0 : i32
    return %c0_i32, %c0_i32_0 : i32, i32
  }
  func.func @transform_4(%arg0: i32) -> (i32, i32) {
    %c0_i32 = arith.constant 0 : i32
    %c0_i32_0 = arith.constant 0 : i32
    %c0_i32_1 = arith.constant 0 : i32
    return %c0_i32, %c0_i32_0 : i32, i32
  }
  func.func @transform_5(%arg0: i32) -> (i32, i32) {
    %c0_i32 = arith.constant 0 : i32
    %c0_i32_0 = arith.constant 0 : i32
    %c0_i32_1 = arith.constant 0 : i32
    return %c0_i32, %c0_i32_0 : i32, i32
  }
  func.func @transform_6(%arg0: i32) -> (i32, i32) {
    %c0_i32 = arith.constant 0 : i32
    %c0_i32_0 = arith.constant 0 : i32
    %c0_i32_1 = arith.constant 0 : i32
    return %c0_i32, %c0_i32_0 : i32, i32
  }
  func.func @transform_7(%arg0: i32) -> (i32, i32) {
    %c0_i32 = arith.constant 0 : i32
    %c0_i32_0 = arith.constant 0 : i32
    return %arg0, %c0_i32 : i32, i32
  }
}

</mosaic_0001>

<llo_original>
// kernel: tpu_custom_call.1
$region0: #{tpu_custom_call.1}
  #allocation0 [shape = 'u32[]', space=smem, size = 0x4, offset = 0x4, fixed_abs, tag = 'smem constant byte address 0x4 - core index']
  #allocation1 [shape = 'u32[144,128]{1,0:T(1,128)}', space=vmem, size = 0x12000, scoped, tag = 'internal scratch']
  %s0 = inlined_call_operand.hbm [shape: f32[8,16], index: 0, kind: input, shape index: {}]
  %s1 = inlined_call_operand.hbm [shape: f32[16,128], index: 1, kind: input, shape index: {}]
  %s2 = inlined_call_operand.vmem [shape: f32[1,128], index: 2, kind: input, shape index: {}]
  %s3 = inlined_call_operand.hbm [shape: f32[128,128], index: 3, kind: input, shape index: {}]
  %s4 = inlined_call_operand.vmem [shape: f32[1,128], index: 4, kind: input, shape index: {}]
  %s5 = inlined_call_operand.hbm [shape: f32[128,128], index: 5, kind: input, shape index: {}]
  %s6 = inlined_call_operand.vmem [shape: f32[1,128], index: 6, kind: input, shape index: {}]
  %s7 = inlined_call_operand.hbm [shape: f32[8,128], index: 7, kind: output, shape index: {}]
  %s8 = sld [smem:[#allocation0]]
  $region54: #{tpu_custom_call.1} parent=0
    _
  %s10 = ssub.s32 1, %s8
  %s11 = scalar_select 0, %s10, %s8
  $region1: #{tpu_custom_call.1} parent=0
    #allocation2 [shape = 'u8[4096]{0}', space=vmem, size = 0x1000, scoped, tag = 'input window, operand 0, single buffered']
    #allocation3 [shape = 's32[1]{0}', space=sflag, size = 0x4, scoped, tag = 'scoped memory for tpu_custom_call.1']
    #allocation4 [shape = 's32[1]{0}', space=sflag, size = 0x4, scoped, tag = 'scoped memory for tpu_custom_call.1']
    #allocation5 [shape = 'u8[8192]{0}', space=vmem, size = 0x2000, scoped, tag = 'input window, operand 1, single buffered']
    #allocation6 [shape = 's32[1]{0}', space=sflag, size = 0x4, scoped, tag = 'scoped memory for tpu_custom_call.1']
    #allocation7 [shape = 'u8[65536]{0}', space=vmem, size = 0x10000, scoped, tag = 'input window, operand 3, single buffered']
    #allocation8 [shape = 'u8[65536]{0}', space=vmem, size = 0x10000, scoped, tag = 'input window, operand 5, single buffered']
    #allocation9 [shape = 's32[1]{0}', space=sflag, size = 0x4, scoped, tag = 'scoped memory for tpu_custom_call.1']
    #allocation10 [shape = 'u8[4096]{0}', space=vmem, size = 0x1000, scoped, tag = 'output window, operand 0, single buffered']
    %12 = vsyncpa [#allocation3], 0
    %13 = vsyncpa [#allocation6], 0
    %14 = vsyncpa [#allocation9], 0
    %15 = vsyncpa [#allocation4], 0
    // Predicated region
    $region2: #{tpu_custom_call.1} parent=1 // pred_check
      _
    $region3: #{tpu_custom_call.1} parent=1 // pred_check_branch
      %17 = sbr.rel (0) target = $region5
    $region4: #{tpu_custom_call.1} parent=1 // pred_region
      %s19 = ssub.s32 128, 128
      %20 = vsyncadd [#allocation3], %s19
      %s22 = sshll.u32 [#allocation2], 4
      %s23 = int_to_ptr.vmem [resolvable:$true] %s22
      %25 = dma.hbm_to_vmem [thread:$0]  %s0, 128, %s23, [#allocation3]
    $region5: #{tpu_custom_call.1} parent=1 // pred_fallthru
      _
    // Predicated region
    $region6: #{tpu_custom_call.1} parent=1 // pred_check
      _
    $region7: #{tpu_custom_call.1} parent=1 // pred_check_branch
      %27 = sbr.rel (0) target = $region9
    $region8: #{tpu_custom_call.1} parent=1 // pred_region
      %s29 = ssub.s32 256, 256
      %30 = vsyncadd [#allocation6], %s29
      %s31 = sshll.u32 [#allocation5], 4
      %s32 = int_to_ptr.vmem [resolvable:$true] %s31
      %37 = dma.hbm_to_vmem [thread:$0]  %s1, 256, %s32, [#allocation6], 128, 128, 8
    $region9: #{tpu_custom_call.1} parent=1 // pred_fallthru
      _
    // Predicated region
    $region10: #{tpu_custom_call.1} parent=1 // pred_check
      _
    $region11: #{tpu_custom_call.1} parent=1 // pred_check_branch
      %39 = sbr.rel (0) target = $region13
    $region12: #{tpu_custom_call.1} parent=1 // pred_region
      _
    $region13: #{tpu_custom_call.1} parent=1 // pred_fallthru
      _
    // Predicated region
    $region14: #{tpu_custom_call.1} parent=1 // pred_check
      _
    $region15: #{tpu_custom_call.1} parent=1 // pred_check_branch
      %41 = sbr.rel (0) target = $region17
    $region16: #{tpu_custom_call.1} parent=1 // pred_region
      %s43 = ssub.s32 2048, 2048
      %44 = vsyncadd [#allocation6], %s43
      %s45 = sshll.u32 [#allocation7], 4
      %s46 = int_to_ptr.vmem [resolvable:$true] %s45
      %51 = dma.hbm_to_vmem [thread:$0]  %s3, 2048, %s46, [#allocation6], 128, 128, 8
    $region17: #{tpu_custom_call.1} parent=1 // pred_fallthru
      _
    // Predicated region
    $region18: #{tpu_custom_call.1} parent=1 // pred_check
      _
    $region19: #{tpu_custom_call.1} parent=1 // pred_check_branch
      %53 = sbr.rel (0) target = $region21
    $region20: #{tpu_custom_call.1} parent=1 // pred_region
      _
    $region21: #{tpu_custom_call.1} parent=1 // pred_fallthru
      _
    // Predicated region
    $region22: #{tpu_custom_call.1} parent=1 // pred_check
      _
    $region23: #{tpu_custom_call.1} parent=1 // pred_check_branch
      %55 = sbr.rel (0) target = $region25
    $region24: #{tpu_custom_call.1} parent=1 // pred_region
      %s57 = ssub.s32 2048, 2048
      %58 = vsyncadd [#allocation9], %s57
      %s59 = sshll.u32 [#allocation8], 4
      %s60 = int_to_ptr.vmem [resolvable:$true] %s59
      %65 = dma.hbm_to_vmem [thread:$0]  %s5, 2048, %s60, [#allocation9], 128, 128, 8
    $region25: #{tpu_custom_call.1} parent=1 // pred_fallthru
      _
    // Predicated region
    $region26: #{tpu_custom_call.1} parent=1 // pred_check
      _
    $region27: #{tpu_custom_call.1} parent=1 // pred_check_branch
      %67 = sbr.rel (0) target = $region29
    $region28: #{tpu_custom_call.1} parent=1 // pred_region
      _
    $region29: #{tpu_custom_call.1} parent=1 // pred_fallthru
      _
    // Predicated region
    $region30: #{tpu_custom_call.1} parent=1 // pred_check
      _
    $region31: #{tpu_custom_call.1} parent=1 // pred_check_branch
      %69 = sbr.rel (0) target = $region33
    $region32: #{tpu_custom_call.1} parent=1 // pred_region
      %70 = dma.done [#allocation3], 128
    $region33: #{tpu_custom_call.1} parent=1 // pred_fallthru
      _
    // Predicated region
    $region34: #{tpu_custom_call.1} parent=1 // pred_check
      _
    $region35: #{tpu_custom_call.1} parent=1 // pred_check_branch
      %72 = sbr.rel (0) target = $region37
    $region36: #{tpu_custom_call.1} parent=1 // pred_region
      %73 = dma.done [#allocation6], 256
    $region37: #{tpu_custom_call.1} parent=1 // pred_fallthru
      _
    // Predicated region
    $region38: #{tpu_custom_call.1} parent=1 // pred_check
      _
    $region39: #{tpu_custom_call.1} parent=1 // pred_check_branch
      %75 = sbr.rel (0) target = $region41
    $region40: #{tpu_custom_call.1} parent=1 // pred_region
      %76 = dma.done [#allocation6], 2048
    $region41: #{tpu_custom_call.1} parent=1 // pred_fallthru
      _
    // Predicated region
    $region42: #{tpu_custom_call.1} parent=1 // pred_check
      _
    $region43: #{tpu_custom_call.1} parent=1 // pred_check_branch
      %78 = sbr.rel (0) target = $region45
    $region44: #{tpu_custom_call.1} parent=1 // pred_region
      %79 = dma.done [#allocation9], 2048
    $region45: #{tpu_custom_call.1} parent=1 // pred_fallthru
      _
    %v80 = vld [vmem:[#allocation2] sm:$0xff]
    %v81 = vld [vmem:[#allocation5] sm:$0xff]
    %v82 = vld [vmem:[#allocation5 + $0x8] sm:$0xff]
    %v83 = vld [vmem:[%s2] sm:$0x1]
    %v85 = vlaneseq
    %v86 = vshrl.u32 %v85, 7
    %v87 = vsub.s32 0, %v86
    %v88 = vrot.slane %v83, %v87
    %vm90 = vcmask 130048
    %v92 = vsel %vm90, %v80, 0
    %94 = vmatprep.subr.mxu0 0.0
    %95 = vmatpush1.msra.mxu0 %v81
    %96 = vmatprep.subr.mxu0 0.0
    %97 = vmatpush1.msra.mxu0 %v82
    %98 = vmatprep.subr.mxu0 0.0
    %99 = vmatpush1.msra.mxu0 0.0
    %100 = vmatprep.subr.mxu0 0.0
    %101 = vmatpush1.msra.mxu0 0.0
    %102 = vmatprep.subr.mxu0 0.0
    %103 = vmatpush1.msra.mxu0 0.0
    %104 = vmatprep.subr.mxu0 0.0
    %105 = vmatpush1.msra.mxu0 0.0
    %106 = vmatprep.subr.mxu0 0.0
    %107 = vmatpush1.msra.mxu0 0.0
    %108 = vmatprep.subr.mxu0 0.0
    %109 = vmatpush1.msra.mxu0 0.0
    %110 = vmatprep.subr.mxu0 0.0
    %111 = vmatpush1.msra.mxu0 0.0
    %112 = vmatprep.subr.mxu0 0.0
    %113 = vmatpush1.msra.mxu0 0.0
    %114 = vmatprep.subr.mxu0 0.0
    %115 = vmatpush1.msra.mxu0 0.0
    %116 = vmatprep.subr.mxu0 0.0
    %117 = vmatpush1.msra.mxu0 0.0
    %118 = vmatprep.subr.mxu0 0.0
    %119 = vmatpush1.msra.mxu0 0.0
    %120 = vmatprep.subr.mxu0 0.0
    %121 = vmatpush1.msra.mxu0 0.0
    %122 = vmatprep.subr.mxu0 0.0
    %123 = vmatpush1.msra.mxu0 0.0
    %124 = vmatprep.subr.mxu0 0.0
    %125 = vmatpush1.msra.mxu0 0.0
    %126 = vmatprep.subr.mxu0 0.0
    %127 = vmatpush1.msra.mxu0 0.0
    %128 = vmatprep.subr.mxu0 0.0
    %129 = vmatpush1.msra.mxu0 0.0
    %130 = vmatprep.subr.mxu0 0.0
    %131 = vmatpush1.msra.mxu0 0.0
    %132 = vmatprep.subr.mxu0 0.0
    %133 = vmatpush1.msra.mxu0 0.0
    %134 = vmatprep.subr.mxu0 0.0
    %135 = vmatpush1.msra.mxu0 0.0
    %136 = vmatprep.subr.mxu0 0.0
    %137 = vmatpush1.msra.mxu0 0.0
    %138 = vmatprep.subr.mxu0 0.0
    %139 = vmatpush1.msra.mxu0 0.0
    %140 = vmatprep.subr.mxu0 0.0
    %141 = vmatpush1.msra.mxu0 0.0
    %142 = vmatprep.subr.mxu0 0.0
    %143 = vmatpush1.msra.mxu0 0.0
    %144 = vmatprep.subr.mxu0 0.0
    %145 = vmatpush1.msra.mxu0 0.0
    %146 = vmatprep.subr.mxu0 0.0
    %147 = vmatpush1.msra.mxu0 0.0
    %148 = vmatprep.subr.mxu0 0.0
    %149 = vmatpush1.msra.mxu0 0.0
    %150 = vmatprep.subr.mxu0 0.0
    %151 = vmatpush1.msra.mxu0 0.0
    %152 = vmatprep.subr.mxu0 0.0
    %153 = vmatpush1.msra.mxu0 0.0
    %154 = vmatprep.subr.mxu0 0.0
    %155 = vmatpush1.msra.mxu0 0.0
    %156 = vmatprep.subr.mxu0 0.0
    %157 = vmatpush1.msra.mxu0 0.0
    %158 = vmatprep.mubr.f32.mxu0 0.0
    %159 = vmatmul.mubr.f32.gmra.mrb[0].mxu0 %v92
    %v160 = vpop.f32.mrb[0].mxu0
    %v161 = vadd.f32 %v88, %v160
    %v162 = vpop.f32.mrb[0].mxu0
    %163 = vdwg.mxu0
    %v164 = vxor.u32 %v161, 2147483648
    %v165 = vmul.f32 %v164, 1.442695
    %v166 = vpow.pop %v165
    %v167 = vadd.f32 %v166, 1.0
    %v168 = vrcp.pop %v167
    %v169 = vmul.f32 1.0, %v168
    %v170 = vmul.f32 %v161, %v169
    %v171 = vld [vmem:[#allocation7] sm:$0xff]
    %v172 = vld [vmem:[#allocation7 + $0x8] sm:$0xff]
    %v173 = vld [vmem:[#allocation7 + $0x10] sm:$0xff]
    %v174 = vld [vmem:[#allocation7 + $0x18] sm:$0xff]
    %v175 = vld [vmem:[#allocation7 + $0x20] sm:$0xff]
    %v176 = vld [vmem:[#allocation7 + $0x28] sm:$0xff]
    %v177 = vld [vmem:[#allocation7 + $0x30] sm:$0xff]
    %v178 = vld [vmem:[#allocation7 + $0x38] sm:$0xff]
    %v179 = vld [vmem:[#allocation7 + $0x40] sm:$0xff]
    %v180 = vld [vmem:[#allocation7 + $0x48] sm:$0xff]
    %v181 = vld [vmem:[#allocation7 + $0x50] sm:$0xff]
    %v182 = vld [vmem:[#allocation7 + $0x58] sm:$0xff]
    %v183 = vld [vmem:[#allocation7 + $0x60] sm:$0xff]
    %v184 = vld [vmem:[#allocation7 + $0x68] sm:$0xff]
    %v185 = vld [vmem:[#allocation7 + $0x70] sm:$0xff]
    %v186 = vld [vmem:[#allocation7 + $0x78] sm:$0xff]
    %v187 = vld [vmem:[%s4] sm:$0x1]
    %v189 = vlaneseq
    %v190 = vshrl.u32 %v189, 7
    %v191 = vsub.s32 0, %v190
    %v192 = vrot.slane %v187, %v191
    %194 = vmatprep.subr.mxu0 0.0
    %195 = vmatpush1.msra.mxu0 %v171
    %196 = vmatprep.subr.mxu0 0.0
    %197 = vmatpush1.msra.mxu0 %v172
    %198 = vmatprep.subr.mxu0 0.0
    %199 = vmatpush1.msra.mxu0 %v173
    %200 = vmatprep.subr.mxu0 0.0
    %201 = vmatpush1.msra.mxu0 %v174
    %202 = vmatprep.subr.mxu0 0.0
    %203 = vmatpush1.msra.mxu0 %v175
    %204 = vmatprep.subr.mxu0 0.0
    %205 = vmatpush1.msra.mxu0 %v176
    %206 = vmatprep.subr.mxu0 0.0
    %207 = vmatpush1.msra.mxu0 %v177
    %208 = vmatprep.subr.mxu0 0.0
    %209 = vmatpush1.msra.mxu0 %v178
    %210 = vmatprep.subr.mxu0 0.0
    %211 = vmatpush1.msra.mxu0 %v179
    %212 = vmatprep.subr.mxu0 0.0
    %213 = vmatpush1.msra.mxu0 %v180
    %214 = vmatprep.subr.mxu0 0.0
    %215 = vmatpush1.msra.mxu0 %v181
    %216 = vmatprep.subr.mxu0 0.0
    %217 = vmatpush1.msra.mxu0 %v182
    %218 = vmatprep.subr.mxu0 0.0
    %219 = vmatpush1.msra.mxu0 %v183
    %220 = vmatprep.subr.mxu0 0.0
    %221 = vmatpush1.msra.mxu0 %v184
    %222 = vmatprep.subr.mxu0 0.0
    %223 = vmatpush1.msra.mxu0 %v185
    %224 = vmatprep.subr.mxu0 0.0
    %225 = vmatpush1.msra.mxu0 %v186
    %226 = vmatprep.subr.mxu0 0.0
    %227 = vmatpush1.msra.mxu0 0.0
    %228 = vmatprep.subr.mxu0 0.0
    %229 = vmatpush1.msra.mxu0 0.0
    %230 = vmatprep.subr.mxu0 0.0
    %231 = vmatpush1.msra.mxu0 0.0
    %232 = vmatprep.subr.mxu0 0.0
    %233 = vmatpush1.msra.mxu0 0.0
    %234 = vmatprep.subr.mxu0 0.0
    %235 = vmatpush1.msra.mxu0 0.0
    %236 = vmatprep.subr.mxu0 0.0
    %237 = vmatpush1.msra.mxu0 0.0
    %238 = vmatprep.subr.mxu0 0.0
    %239 = vmatpush1.msra.mxu0 0.0
    %240 = vmatprep.subr.mxu0 0.0
    %241 = vmatpush1.msra.mxu0 0.0
    %242 = vmatprep.subr.mxu0 0.0
    %243 = vmatpush1.msra.mxu0 0.0
    %244 = vmatprep.subr.mxu0 0.0
    %245 = vmatpush1.msra.mxu0 0.0
    %246 = vmatprep.subr.mxu0 0.0
    %247 = vmatpush1.msra.mxu0 0.0
    %248 = vmatprep.subr.mxu0 0.0
    %249 = vmatpush1.msra.mxu0 0.0
    %250 = vmatprep.subr.mxu0 0.0
    %251 = vmatpush1.msra.mxu0 0.0
    %252 = vmatprep.subr.mxu0 0.0
    %253 = vmatpush1.msra.mxu0 0.0
    %254 = vmatprep.subr.mxu0 0.0
    %255 = vmatpush1.msra.mxu0 0.0
    %256 = vmatprep.subr.mxu0 0.0
    %257 = vmatpush1.msra.mxu0 0.0
    %258 = vmatprep.mubr.f32.mxu0 0.0
    %259 = vmatmul.mubr.f32.gmra.mrb[0].mxu0 %v170
    %v260 = vpop.f32.mrb[0].mxu0
    %v261 = vadd.f32 %v192, %v260
    %v262 = vpop.f32.mrb[0].mxu0
    %263 = vdwg.mxu0
    %v264 = vxor.u32 %v261, 2147483648
    %v265 = vmul.f32 %v264, 1.442695
    %v266 = vpow.pop %v265
    %v267 = vadd.f32 %v266, 1.0
    %v268 = vrcp.pop %v267
    %v269 = vmul.f32 1.0, %v268
    %v270 = vmul.f32 %v261, %v269
    %v271 = vld [vmem:[#allocation8] sm:$0xff]
    %v272 = vld [vmem:[#allocation8 + $0x8] sm:$0xff]
    %v273 = vld [vmem:[#allocation8 + $0x10] sm:$0xff]
    %v274 = vld [vmem:[#allocation8 + $0x18] sm:$0xff]
    %v275 = vld [vmem:[#allocation8 + $0x20] sm:$0xff]
    %v276 = vld [vmem:[#allocation8 + $0x28] sm:$0xff]
    %v277 = vld [vmem:[#allocation8 + $0x30] sm:$0xff]
    %v278 = vld [vmem:[#allocation8 + $0x38] sm:$0xff]
    %v279 = vld [vmem:[#allocation8 + $0x40] sm:$0xff]
    %v280 = vld [vmem:[#allocation8 + $0x48] sm:$0xff]
    %v281 = vld [vmem:[#allocation8 + $0x50] sm:$0xff]
    %v282 = vld [vmem:[#allocation8 + $0x58] sm:$0xff]
    %v283 = vld [vmem:[#allocation8 + $0x60] sm:$0xff]
    %v284 = vld [vmem:[#allocation8 + $0x68] sm:$0xff]
    %v285 = vld [vmem:[#allocation8 + $0x70] sm:$0xff]
    %v286 = vld [vmem:[#allocation8 + $0x78] sm:$0xff]
    %v287 = vld [vmem:[%s6] sm:$0x1]
    %v289 = vlaneseq
    %v290 = vshrl.u32 %v289, 7
    %v291 = vsub.s32 0, %v290
    %v292 = vrot.slane %v287, %v291
    %294 = vmatprep.subr.mxu0 0.0
    %295 = vmatpush1.msra.mxu0 %v271
    %296 = vmatprep.subr.mxu0 0.0
    %297 = vmatpush1.msra.mxu0 %v272
    %298 = vmatprep.subr.mxu0 0.0
    %299 = vmatpush1.msra.mxu0 %v273
    %300 = vmatprep.subr.mxu0 0.0
    %301 = vmatpush1.msra.mxu0 %v274
    %302 = vmatprep.subr.mxu0 0.0
    %303 = vmatpush1.msra.mxu0 %v275
    %304 = vmatprep.subr.mxu0 0.0
    %305 = vmatpush1.msra.mxu0 %v276
    %306 = vmatprep.subr.mxu0 0.0
    %307 = vmatpush1.msra.mxu0 %v277
    %308 = vmatprep.subr.mxu0 0.0
    %309 = vmatpush1.msra.mxu0 %v278
    %310 = vmatprep.subr.mxu0 0.0
    %311 = vmatpush1.msra.mxu0 %v279
    %312 = vmatprep.subr.mxu0 0.0
    %313 = vmatpush1.msra.mxu0 %v280
    %314 = vmatprep.subr.mxu0 0.0
    %315 = vmatpush1.msra.mxu0 %v281
    %316 = vmatprep.subr.mxu0 0.0
    %317 = vmatpush1.msra.mxu0 %v282
    %318 = vmatprep.subr.mxu0 0.0
    %319 = vmatpush1.msra.mxu0 %v283
    %320 = vmatprep.subr.mxu0 0.0
    %321 = vmatpush1.msra.mxu0 %v284
    %322 = vmatprep.subr.mxu0 0.0
    %323 = vmatpush1.msra.mxu0 %v285
    %324 = vmatprep.subr.mxu0 0.0
    %325 = vmatpush1.msra.mxu0 %v286
    %326 = vmatprep.subr.mxu0 0.0
    %327 = vmatpush1.msra.mxu0 0.0
    %328 = vmatprep.subr.mxu0 0.0
    %329 = vmatpush1.msra.mxu0 0.0
    %330 = vmatprep.subr.mxu0 0.0
    %331 = vmatpush1.msra.mxu0 0.0
    %332 = vmatprep.subr.mxu0 0.0
    %333 = vmatpush1.msra.mxu0 0.0
    %334 = vmatprep.subr.mxu0 0.0
    %335 = vmatpush1.msra.mxu0 0.0
    %336 = vmatprep.subr.mxu0 0.0
    %337 = vmatpush1.msra.mxu0 0.0
    %338 = vmatprep.subr.mxu0 0.0
    %339 = vmatpush1.msra.mxu0 0.0
    %340 = vmatprep.subr.mxu0 0.0
    %341 = vmatpush1.msra.mxu0 0.0
    %342 = vmatprep.subr.mxu0 0.0
    %343 = vmatpush1.msra.mxu0 0.0
    %344 = vmatprep.subr.mxu0 0.0
    %345 = vmatpush1.msra.mxu0 0.0
    %346 = vmatprep.subr.mxu0 0.0
    %347 = vmatpush1.msra.mxu0 0.0
    %348 = vmatprep.subr.mxu0 0.0
    %349 = vmatpush1.msra.mxu0 0.0
    %350 = vmatprep.subr.mxu0 0.0
    %351 = vmatpush1.msra.mxu0 0.0
    %352 = vmatprep.subr.mxu0 0.0
    %353 = vmatpush1.msra.mxu0 0.0
    %354 = vmatprep.subr.mxu0 0.0
    %355 = vmatpush1.msra.mxu0 0.0
    %356 = vmatprep.subr.mxu0 0.0
    %357 = vmatpush1.msra.mxu0 0.0
    %358 = vmatprep.mubr.f32.mxu0 0.0
    %359 = vmatmul.mubr.f32.gmra.mrb[0].mxu0 %v270
    %v360 = vpop.f32.mrb[0].mxu0
    %v361 = vadd.f32 %v292, %v360
    %v362 = vpop.f32.mrb[0].mxu0
    %363 = vdwg.mxu0
    %364 = vst [vmem:[#allocation10] sm:$0xff] %v361
    // Predicated region
    $region46: #{tpu_custom_call.1} parent=1 // pred_check
      _
    $region47: #{tpu_custom_call.1} parent=1 // pred_check_branch
      %366 = sbr.rel (0) target = $region49
    $region48: #{tpu_custom_call.1} parent=1 // pred_region
      %s368 = ssub.s32 128, 128
      %369 = vsyncadd [#allocation4], %s368
      %s371 = sshll.u32 [#allocation10], 4
      %s372 = int_to_ptr.vmem [resolvable:$true] %s371
      %374 = dma.vmem_to_hbm [thread:$0]  %s372, 128, %s7, [#allocation4]
    $region49: #{tpu_custom_call.1} parent=1 // pred_fallthru
      _
    // Predicated region
    $region50: #{tpu_custom_call.1} parent=1 // pred_check
      _
    $region51: #{tpu_custom_call.1} parent=1 // pred_check_branch
      %376 = sbr.rel (0) target = $region53
    $region52: #{tpu_custom_call.1} parent=1 // pred_region
      %377 = dma.done [#allocation4], 128
    $region53: #{tpu_custom_call.1} parent=1 // pred_fallthru
      _
    %378 = vsyncpa [#allocation3], 1
    %379 = vsyncpa [#allocation6], 1
    %380 = vsyncpa [#allocation9], 1
    %381 = vsyncpa [#allocation4], 1

</llo_original>
